<compile_context>
chip_gen: v5e
topology: v5e:2x2
jax: 0.10.0
libtpu: 0.0.40
codegen_flags: <defaults>
</compile_context>

<pallas_src>
import jax
import jax.numpy as jnp
from jax import lax
from jax.experimental import pallas as pl
from jax.experimental.pallas import tpu as pltpu  # noqa: F401 (TPU backend)

EPS = 1e-5


def gblock_kernel(s_ref, w_ref, gamma_ref, beta_ref, o_ref):
    """Fused phase-decomposed ConvTranspose2d + BatchNorm2d(train) + ReLU.

    s_ref:      (4, 4*Cin, M) bf16 -- per-output-phase stacked input views,
                lane axis M = N*H*W (W fastest).
    w_ref:      (4, Cout_pad, 4*Cin) bf16 -- per-phase channel-mixing matrices.
    gamma/beta: (Cout_pad, 1) f32 (zero-padded past Cout).
    o_ref:      (Cout_pad, 4*M) bf16, phase blocks [py*2+px] concatenated on lanes.
    Specialized to K=4, stride=2, padding=1 (the G_block defaults).
    """
    cout = o_ref.shape[0]
    m = s_ref.shape[-1]
    inv_count = 1.0 / (4 * m)                          # BN averages over N*Ho*Wo = 4*M

    # ---- transposed conv: one merged MXU dot per output phase, BN stats fused ----
    accs = []
    tot = jnp.zeros((cout, 1), dtype=jnp.float32)
    tot_sq = jnp.zeros((cout, 1), dtype=jnp.float32)
    for f in range(4):                                  # f = py*2 + px
        acc = jnp.dot(w_ref[f], s_ref[f],
                      preferred_element_type=jnp.float32)        # (Cout_pad, M) f32
        tot = tot + jnp.sum(acc, axis=-1, keepdims=True)
        tot_sq = tot_sq + jnp.sum(acc * acc, axis=-1, keepdims=True)
        accs.append(acc)                                # stays in vregs, no o_ref staging

    # ---- BatchNorm2d (training-mode batch stats) + ReLU; affine folded to 1 FMA ----
    mean = tot * inv_count
    var = tot_sq * inv_count - mean * mean              # single-pass variance (f32)
    inv = lax.rsqrt(var + EPS)
    scale = inv * gamma_ref[...]
    shift = beta_ref[...] - mean * scale
    for f in range(4):                                  # single write of o_ref, bf16 store
        o_ref[:, f * m:(f + 1) * m] = jnp.maximum(
            accs[f] * scale + shift, 0.0).astype(o_ref.dtype)


def g_block_forward(x, w_t, gamma, beta, *, kernel_size=4, stride=2, padding=1):
    """x: (N, Cin, H, W).  w_t: ConvTranspose2d weight (Cin, Cout, K, K).
    Returns (N, Cout, 2H, 2W) in bf16 (intentional output precision)."""
    N, Cin, H, W = x.shape
    Cin_w, Cout, K, _ = w_t.shape
    assert Cin_w == Cin and K == kernel_size
    assert K == 4 and stride == 2 and padding == 1, "specialized to G_block defaults"
    Ho = (H - 1) * stride - 2 * padding + K
    Wo = (W - 1) * stride - 2 * padding + K
    M = N * H * W
    Cout_pad = -(-Cout // 8) * 8                        # full f32 sublane

    # ---- 9 shifted views of the 1-padded input (no dilation, no im2col) ----
    # views[u][v][ci, n*H*W + a*W + b] = xpad[n, ci, a+u, b+v]
    xp = jnp.pad(x, ((0, 0), (0, 0), (1, 1), (1, 1)))
    xt = jnp.transpose(xp, (1, 0, 2, 3))                # (Cin, N, H+2, W+2)
    views = [[xt[:, :, u:u + H, v:v + W].reshape(Cin, M) for v in range(3)]
             for u in range(3)]

    # per-tap channel-mixing weights, Cout zero-padded (dead rows produce exact 0s)
    w_km = jnp.transpose(w_t, (2, 3, 1, 0))             # (K, K, Cout, Cin)
    w_km = jnp.pad(w_km, ((0, 0), (0, 0), (0, Cout_pad - Cout), (0, 0)))

    # per-output-phase operands: the 4 taps hit by each phase merged along the
    # contraction axis (Cout_pad, 4*Cin) x (4*Cin, M).
    # NOTE: at production Cin keep the 9 unique views + per-tap dots instead;
    # this per-phase duplication costs extra input bytes (irrelevant at toy sizes).
    s_list, w_list = [], []
    for py in range(2):
        for px in range(2):
            s_parts, w_parts = [], []
            for dy in range(2):
                for dx in range(2):
                    ky = 3 - py - 2 * dy                # kernel tap hit by this phase/offset
                    kx = 3 - px - 2 * dx
                    s_parts.append(views[py + dy][px + dx])   # (Cin, M)
                    w_parts.append(w_km[ky, kx])              # (Cout_pad, Cin)
            s_list.append(jnp.concatenate(s_parts, axis=0))   # (4*Cin, M)
            w_list.append(jnp.concatenate(w_parts, axis=1))   # (Cout_pad, 4*Cin)
    s_ph = jnp.stack(s_list).astype(jnp.bfloat16)       # (4, 4*Cin, M)
    w_ph = jnp.stack(w_list).astype(jnp.bfloat16)       # (4, Cout_pad, 4*Cin)

    gamma2 = jnp.pad(gamma.astype(jnp.float32), (0, Cout_pad - Cout)).reshape(Cout_pad, 1)
    beta2 = jnp.pad(beta.astype(jnp.float32), (0, Cout_pad - Cout)).reshape(Cout_pad, 1)

    # Single grid-less VMEM-resident invocation (~130 KB total footprint).
    # Production: grid=(M//tile_m,) "parallel" + split BN accumulation (v7x 2 TCs),
    # vmem_limit_bytes re-derived for v7x's 64 MiB VMEM.
    out_flat = pl.pallas_call(
        gblock_kernel,
        out_shape=jax.ShapeDtypeStruct((Cout_pad, 4 * M), jnp.bfloat16),
        in_specs=[
            pl.BlockSpec((4, 4 * Cin, M), lambda: (0, 0, 0)),
            pl.BlockSpec((4, Cout_pad, 4 * Cin), lambda: (0, 0, 0)),
            pl.BlockSpec((Cout_pad, 1), lambda: (0, 0)),
            pl.BlockSpec((Cout_pad, 1), lambda: (0, 0)),
        ],
        out_specs=pl.BlockSpec((Cout_pad, 4 * M), lambda: (0, 0)),
    )(s_ph, w_ph, gamma2, beta2)

    # de-interleave phases & drop Cout padding:
    # (Cout, py, px, N, H, W) -> (N, Cout, H, py, W, px) -> (N, Cout, Ho, Wo)
    out6 = out_flat[:Cout].reshape(Cout, 2, 2, N, H, W)
    out = jnp.transpose(out6, (3, 0, 4, 1, 5, 2)).reshape(N, Cout, Ho, Wo)
    # TODO(synk): BatchNorm2d running_mean/running_var state updates are not emitted
    # (normalization itself matches training-mode batch statistics).
    return out


def reference_forward(x, w_t, gamma, beta, *, stride=2, padding=1):
    """Pure-JAX reference (lax dilated conv == ConvTranspose2d, + BN + ReLU).
    Conv operands cast to bf16 to match the kernel's MXU precision; f32 accum
    and f32 BN (two-pass centered variance)."""
    K = w_t.shape[2]
    w_conv = jnp.transpose(jnp.flip(w_t, axis=(2, 3)), (1, 0, 2, 3))  # OIHW
    p = K - 1 - padding
    y = lax.conv_general_dilated(
        x.astype(jnp.bfloat16), w_conv.astype(jnp.bfloat16),
        window_strides=(1, 1), padding=[(p, p), (p, p)],
        lhs_dilation=(stride, stride),
        dimension_numbers=("NCHW", "OIHW", "NCHW"),
        preferred_element_type=jnp.float32)
    mean = jnp.mean(y, axis=(0, 2, 3), keepdims=True)
    var = jnp.mean((y - mean) ** 2, axis=(0, 2, 3), keepdims=True)
    y_hat = (y - mean) * lax.rsqrt(var + EPS)
    y_hat = y_hat * gamma.reshape(1, -1, 1, 1) + beta.reshape(1, -1, 1, 1)
    return jnp.maximum(y_hat, 0.0)


if __name__ == "__main__":
    key = jax.random.PRNGKey(0)
    k_x, k_w = jax.random.split(key)

    N, Cin, H, W = 2, 3, 16, 16       # module default in_channels=3
    Cout, K = 4, 4

    x = jax.random.normal(k_x, (N, Cin, H, W), dtype=jnp.float32)
    # ConvTranspose2d weight (in_channels, out_channels, K, K), bias=False.
    w_t = jax.random.normal(k_w, (Cin, Cout, K, K), dtype=jnp.float32) * 0.1
    # BatchNorm2d default init: gamma=1, beta=0.
    gamma = jnp.ones((Cout,), dtype=jnp.float32)
    beta = jnp.zeros((Cout,), dtype=jnp.float32)

    out = jax.block_until_ready(g_block_forward(x, w_t, gamma, beta))
    ref = jax.block_until_ready(reference_forward(x, w_t, gamma, beta))

    assert out.shape == (N, Cout, 2 * H, 2 * W), out.shape
    # Kernel emits bf16 (intentional bandwidth choice) and uses single-pass BN
    # variance, so compare the f32 upcast with a bf16-appropriate tolerance.
    assert jnp.allclose(out.astype(jnp.float32), ref, atol=2e-2, rtol=2e-2), \
        float(jnp.max(jnp.abs(out.astype(jnp.float32) - ref)))

    print("KERNEL_OK")
</pallas_src>

<mosaic_0001>
module attributes {stable_mosaic.version = 11 : i64} {
  func.func @gblock_kernel(%arg0: memref<4x12x512xbf16, #tpu.memory_space<vmem>>, %arg1: memref<4x8x12xbf16, #tpu.memory_space<vmem>>, %arg2: memref<8x1xf32, #tpu.memory_space<vmem>>, %arg3: memref<8x1xf32, #tpu.memory_space<vmem>>, %arg4: memref<8x2048xbf16, #tpu.memory_space<vmem>>) attributes {dimension_semantics = [], scalar_prefetch = 0 : i64, scratch_operands = 0 : i64, tpu.core_type = #tpu.core_type<tc>} {
    %cst = arith.constant 0.000000e+00 : f32
    %0 = vector.broadcast %cst : f32 to vector<8x1xf32>
    %cst_0 = arith.constant 0.000000e+00 : f32
    %1 = vector.broadcast %cst_0 : f32 to vector<8x1xf32>
    %c0 = arith.constant 0 : index
    %c0_1 = arith.constant 0 : index
    %c0_2 = arith.constant 0 : index
    %2 = vector.load %arg1[%c0, %c0_1, %c0_2] : memref<4x8x12xbf16, #tpu.memory_space<vmem>>, vector<1x8x12xbf16>
    %3 = vector.shape_cast %2 : vector<1x8x12xbf16> to vector<8x12xbf16>
    %c0_3 = arith.constant 0 : index
    %c0_4 = arith.constant 0 : index
    %c0_5 = arith.constant 0 : index
    %4 = vector.load %arg0[%c0_3, %c0_4, %c0_5] : memref<4x12x512xbf16, #tpu.memory_space<vmem>>, vector<1x12x512xbf16>
    %5 = vector.shape_cast %4 : vector<1x12x512xbf16> to vector<12x512xbf16>
    %cst_6 = arith.constant dense<0.000000e+00> : vector<8x512xf32>
    %6 = tpu.matmul %3, %5, %cst_6 {dimension_numbers = #tpu.dot_dimension_numbers<[1], [0], [0], [1], [0, 0, 1, 1], [], []>} : vector<8x12xbf16>, vector<12x512xbf16>, vector<8x512xf32> -> vector<8x512xf32>
    %cst_7 = arith.constant dense<0.000000e+00> : vector<8xf32>
    %7 = vector.multi_reduction <add>, %6, %cst_7 [1] : vector<8x512xf32> to vector<8xf32>
    %8 = vector.shape_cast %7 : vector<8xf32> to vector<8x1xf32>
    %9 = arith.addf %0, %8 : vector<8x1xf32>
    %10 = arith.mulf %6, %6 : vector<8x512xf32>
    %cst_8 = arith.constant dense<0.000000e+00> : vector<8xf32>
    %11 = vector.multi_reduction <add>, %10, %cst_8 [1] : vector<8x512xf32> to vector<8xf32>
    %12 = vector.shape_cast %11 : vector<8xf32> to vector<8x1xf32>
    %13 = arith.addf %1, %12 : vector<8x1xf32>
    %c1 = arith.constant 1 : index
    %c0_9 = arith.constant 0 : index
    %c0_10 = arith.constant 0 : index
    %14 = vector.load %arg1[%c1, %c0_9, %c0_10] : memref<4x8x12xbf16, #tpu.memory_space<vmem>>, vector<1x8x12xbf16>
    %15 = vector.shape_cast %14 : vector<1x8x12xbf16> to vector<8x12xbf16>
    %c1_11 = arith.constant 1 : index
    %c0_12 = arith.constant 0 : index
    %c0_13 = arith.constant 0 : index
    %16 = vector.load %arg0[%c1_11, %c0_12, %c0_13] : memref<4x12x512xbf16, #tpu.memory_space<vmem>>, vector<1x12x512xbf16>
    %17 = vector.shape_cast %16 : vector<1x12x512xbf16> to vector<12x512xbf16>
    %cst_14 = arith.constant dense<0.000000e+00> : vector<8x512xf32>
    %18 = tpu.matmul %15, %17, %cst_14 {dimension_numbers = #tpu.dot_dimension_numbers<[1], [0], [0], [1], [0, 0, 1, 1], [], []>} : vector<8x12xbf16>, vector<12x512xbf16>, vector<8x512xf32> -> vector<8x512xf32>
    %cst_15 = arith.constant dense<0.000000e+00> : vector<8xf32>
    %19 = vector.multi_reduction <add>, %18, %cst_15 [1] : vector<8x512xf32> to vector<8xf32>
    %20 = vector.shape_cast %19 : vector<8xf32> to vector<8x1xf32>
    %21 = arith.addf %9, %20 : vector<8x1xf32>
    %22 = arith.mulf %18, %18 : vector<8x512xf32>
    %cst_16 = arith.constant dense<0.000000e+00> : vector<8xf32>
    %23 = vector.multi_reduction <add>, %22, %cst_16 [1] : vector<8x512xf32> to vector<8xf32>
    %24 = vector.shape_cast %23 : vector<8xf32> to vector<8x1xf32>
    %25 = arith.addf %13, %24 : vector<8x1xf32>
    %c2 = arith.constant 2 : index
    %c0_17 = arith.constant 0 : index
    %c0_18 = arith.constant 0 : index
    %26 = vector.load %arg1[%c2, %c0_17, %c0_18] : memref<4x8x12xbf16, #tpu.memory_space<vmem>>, vector<1x8x12xbf16>
    %27 = vector.shape_cast %26 : vector<1x8x12xbf16> to vector<8x12xbf16>
    %c2_19 = arith.constant 2 : index
    %c0_20 = arith.constant 0 : index
    %c0_21 = arith.constant 0 : index
    %28 = vector.load %arg0[%c2_19, %c0_20, %c0_21] : memref<4x12x512xbf16, #tpu.memory_space<vmem>>, vector<1x12x512xbf16>
    %29 = vector.shape_cast %28 : vector<1x12x512xbf16> to vector<12x512xbf16>
    %cst_22 = arith.constant dense<0.000000e+00> : vector<8x512xf32>
    %30 = tpu.matmul %27, %29, %cst_22 {dimension_numbers = #tpu.dot_dimension_numbers<[1], [0], [0], [1], [0, 0, 1, 1], [], []>} : vector<8x12xbf16>, vector<12x512xbf16>, vector<8x512xf32> -> vector<8x512xf32>
    %cst_23 = arith.constant dense<0.000000e+00> : vector<8xf32>
    %31 = vector.multi_reduction <add>, %30, %cst_23 [1] : vector<8x512xf32> to vector<8xf32>
    %32 = vector.shape_cast %31 : vector<8xf32> to vector<8x1xf32>
    %33 = arith.addf %21, %32 : vector<8x1xf32>
    %34 = arith.mulf %30, %30 : vector<8x512xf32>
    %cst_24 = arith.constant dense<0.000000e+00> : vector<8xf32>
    %35 = vector.multi_reduction <add>, %34, %cst_24 [1] : vector<8x512xf32> to vector<8xf32>
    %36 = vector.shape_cast %35 : vector<8xf32> to vector<8x1xf32>
    %37 = arith.addf %25, %36 : vector<8x1xf32>
    %c3 = arith.constant 3 : index
    %c0_25 = arith.constant 0 : index
    %c0_26 = arith.constant 0 : index
    %38 = vector.load %arg1[%c3, %c0_25, %c0_26] : memref<4x8x12xbf16, #tpu.memory_space<vmem>>, vector<1x8x12xbf16>
    %39 = vector.shape_cast %38 : vector<1x8x12xbf16> to vector<8x12xbf16>
    %c3_27 = arith.constant 3 : index
    %c0_28 = arith.constant 0 : index
    %c0_29 = arith.constant 0 : index
    %40 = vector.load %arg0[%c3_27, %c0_28, %c0_29] : memref<4x12x512xbf16, #tpu.memory_space<vmem>>, vector<1x12x512xbf16>
    %41 = vector.shape_cast %40 : vector<1x12x512xbf16> to vector<12x512xbf16>
    %cst_30 = arith.constant dense<0.000000e+00> : vector<8x512xf32>
    %42 = tpu.matmul %39, %41, %cst_30 {dimension_numbers = #tpu.dot_dimension_numbers<[1], [0], [0], [1], [0, 0, 1, 1], [], []>} : vector<8x12xbf16>, vector<12x512xbf16>, vector<8x512xf32> -> vector<8x512xf32>
    %cst_31 = arith.constant dense<0.000000e+00> : vector<8xf32>
    %43 = vector.multi_reduction <add>, %42, %cst_31 [1] : vector<8x512xf32> to vector<8xf32>
    %44 = vector.shape_cast %43 : vector<8xf32> to vector<8x1xf32>
    %45 = arith.addf %33, %44 : vector<8x1xf32>
    %46 = arith.mulf %42, %42 : vector<8x512xf32>
    %cst_32 = arith.constant dense<0.000000e+00> : vector<8xf32>
    %47 = vector.multi_reduction <add>, %46, %cst_32 [1] : vector<8x512xf32> to vector<8xf32>
    %48 = vector.shape_cast %47 : vector<8xf32> to vector<8x1xf32>
    %49 = arith.addf %37, %48 : vector<8x1xf32>
    %cst_33 = arith.constant 4.8828125E-4 : f32
    %50 = vector.broadcast %cst_33 : f32 to vector<8x1xf32>
    %51 = arith.mulf %45, %50 : vector<8x1xf32>
    %cst_34 = arith.constant 4.8828125E-4 : f32
    %52 = vector.broadcast %cst_34 : f32 to vector<8x1xf32>
    %53 = arith.mulf %49, %52 : vector<8x1xf32>
    %54 = arith.mulf %51, %51 : vector<8x1xf32>
    %55 = arith.subf %53, %54 : vector<8x1xf32>
    %cst_35 = arith.constant 9.99999974E-6 : f32
    %56 = vector.broadcast %cst_35 : f32 to vector<8x1xf32>
    %57 = arith.addf %55, %56 : vector<8x1xf32>
    %58 = math.rsqrt %57 : vector<8x1xf32>
    %c0_36 = arith.constant 0 : index
    %c0_37 = arith.constant 0 : index
    %59 = vector.load %arg2[%c0_36, %c0_37] : memref<8x1xf32, #tpu.memory_space<vmem>>, vector<8x1xf32>
    %60 = arith.mulf %58, %59 : vector<8x1xf32>
    %c0_38 = arith.constant 0 : index
    %c0_39 = arith.constant 0 : index
    %61 = vector.load %arg3[%c0_38, %c0_39] : memref<8x1xf32, #tpu.memory_space<vmem>>, vector<8x1xf32>
    %62 = arith.mulf %51, %60 : vector<8x1xf32>
    %63 = arith.subf %61, %62 : vector<8x1xf32>
    %64 = vector.broadcast %60 : vector<8x1xf32> to vector<8x512xf32>
    %65 = arith.mulf %6, %64 : vector<8x512xf32>
    %66 = vector.broadcast %63 : vector<8x1xf32> to vector<8x512xf32>
    %67 = arith.addf %65, %66 : vector<8x512xf32>
    %cst_40 = arith.constant 0.000000e+00 : f32
    %68 = vector.broadcast %cst_40 : f32 to vector<8x512xf32>
    %69 = arith.maximumf %67, %68 : vector<8x512xf32>
    %70 = arith.truncf %69 : vector<8x512xf32> to vector<8x512xbf16>
    %c0_41 = arith.constant 0 : index
    %c0_42 = arith.constant 0 : index
    %71 = vector.load %arg4[%c0_41, %c0_42] : memref<8x2048xbf16, #tpu.memory_space<vmem>>, vector<8x512xbf16>
    tpu.vector_store %arg4[%c0_41, %c0_42], %70 {strides = array<i32>} : memref<8x2048xbf16, #tpu.memory_space<vmem>>, vector<8x512xbf16>,
    %72 = vector.broadcast %60 : vector<8x1xf32> to vector<8x512xf32>
    %73 = arith.mulf %18, %72 : vector<8x512xf32>
    %74 = vector.broadcast %63 : vector<8x1xf32> to vector<8x512xf32>
    %75 = arith.addf %73, %74 : vector<8x512xf32>
    %cst_43 = arith.constant 0.000000e+00 : f32
    %76 = vector.broadcast %cst_43 : f32 to vector<8x512xf32>
    %77 = arith.maximumf %75, %76 : vector<8x512xf32>
    %78 = arith.truncf %77 : vector<8x512xf32> to vector<8x512xbf16>
    %c0_44 = arith.constant 0 : index
    %c512 = arith.constant 512 : index
    %79 = vector.load %arg4[%c0_44, %c512] : memref<8x2048xbf16, #tpu.memory_space<vmem>>, vector<8x512xbf16>
    tpu.vector_store %arg4[%c0_44, %c512], %78 {strides = array<i32>} : memref<8x2048xbf16, #tpu.memory_space<vmem>>, vector<8x512xbf16>,
    %80 = vector.broadcast %60 : vector<8x1xf32> to vector<8x512xf32>
    %81 = arith.mulf %30, %80 : vector<8x512xf32>
    %82 = vector.broadcast %63 : vector<8x1xf32> to vector<8x512xf32>
    %83 = arith.addf %81, %82 : vector<8x512xf32>
    %cst_45 = arith.constant 0.000000e+00 : f32
    %84 = vector.broadcast %cst_45 : f32 to vector<8x512xf32>
    %85 = arith.maximumf %83, %84 : vector<8x512xf32>
    %86 = arith.truncf %85 : vector<8x512xf32> to vector<8x512xbf16>
    %c0_46 = arith.constant 0 : index
    %c1024 = arith.constant 1024 : index
    %87 = vector.load %arg4[%c0_46, %c1024] : memref<8x2048xbf16, #tpu.memory_space<vmem>>, vector<8x512xbf16>
    tpu.vector_store %arg4[%c0_46, %c1024], %86 {strides = array<i32>} : memref<8x2048xbf16, #tpu.memory_space<vmem>>, vector<8x512xbf16>,
    %88 = vector.broadcast %60 : vector<8x1xf32> to vector<8x512xf32>
    %89 = arith.mulf %42, %88 : vector<8x512xf32>
    %90 = vector.broadcast %63 : vector<8x1xf32> to vector<8x512xf32>
    %91 = arith.addf %89, %90 : vector<8x512xf32>
    %cst_47 = arith.constant 0.000000e+00 : f32
    %92 = vector.broadcast %cst_47 : f32 to vector<8x512xf32>
    %93 = arith.maximumf %91, %92 : vector<8x512xf32>
    %94 = arith.truncf %93 : vector<8x512xf32> to vector<8x512xbf16>
    %c0_48 = arith.constant 0 : index
    %c1536 = arith.constant 1536 : index
    %95 = vector.load %arg4[%c0_48, %c1536] : memref<8x2048xbf16, #tpu.memory_space<vmem>>, vector<8x512xbf16>
    tpu.vector_store %arg4[%c0_48, %c1536], %94 {strides = array<i32>} : memref<8x2048xbf16, #tpu.memory_space<vmem>>, vector<8x512xbf16>,
    return
  }
}

</mosaic_0001>

<llo_original>
// kernel: tpu_custom_call.1
$region0: #{tpu_custom_call.1}
  #allocation0 [shape = 'u32[]', space=smem, size = 0x4, offset = 0x4, fixed_abs, tag = 'smem constant byte address 0x4 - core index']
  #allocation1 [shape = 'u32[72,128]{1,0:T(1,128)}', space=vmem, size = 0x9000, scoped, tag = 'internal scratch']
  %s0 = inlined_call_operand.vmem [shape: bf16[4,12,512], index: 0, kind: input, shape index: {}]
  %s1 = inlined_call_operand.vmem [shape: bf16[4,8,12], index: 1, kind: input, shape index: {}]
  %s2 = inlined_call_operand.vmem [shape: f32[8,1], index: 2, kind: input, shape index: {}]
  %s3 = inlined_call_operand.vmem [shape: f32[8,1], index: 3, kind: input, shape index: {}]
  %s4 = inlined_call_operand.hbm [shape: bf16[8,2048], index: 4, kind: output, shape index: {}]
  %s5 = sld [smem:[#allocation0]]
  $region26: #{tpu_custom_call.1} parent=0
    _
  %s7 = ssub.s32 1, %s5
  %s8 = scalar_select 0, %s7, %s5
  $region1: #{tpu_custom_call.1} parent=0
    #allocation2 [shape = 'u8[32768]{0}', space=vmem, size = 0x8000, scoped, tag = 'output window, operand 0, single buffered']
    #allocation3 [shape = 's32[1]{0}', space=sflag, size = 0x4, scoped, tag = 'scoped memory for tpu_custom_call.1']
    %9 = vsyncpa [#allocation3], 0
    // Predicated region
    $region2: #{tpu_custom_call.1} parent=1 // pred_check
      _
    $region3: #{tpu_custom_call.1} parent=1 // pred_check_branch
      %11 = sbr.rel (0) target = $region5
    $region4: #{tpu_custom_call.1} parent=1 // pred_region
      _
    $region5: #{tpu_custom_call.1} parent=1 // pred_fallthru
      _
    // Predicated region
    $region6: #{tpu_custom_call.1} parent=1 // pred_check
      _
    $region7: #{tpu_custom_call.1} parent=1 // pred_check_branch
      %13 = sbr.rel (0) target = $region9
    $region8: #{tpu_custom_call.1} parent=1 // pred_region
      _
    $region9: #{tpu_custom_call.1} parent=1 // pred_fallthru
      _
    // Predicated region
    $region10: #{tpu_custom_call.1} parent=1 // pred_check
      _
    $region11: #{tpu_custom_call.1} parent=1 // pred_check_branch
      %15 = sbr.rel (0) target = $region13
    $region12: #{tpu_custom_call.1} parent=1 // pred_region
      _
    $region13: #{tpu_custom_call.1} parent=1 // pred_fallthru
      _
    // Predicated region
    $region14: #{tpu_custom_call.1} parent=1 // pred_check
      _
    $region15: #{tpu_custom_call.1} parent=1 // pred_check_branch
      %17 = sbr.rel (0) target = $region17
    $region16: #{tpu_custom_call.1} parent=1 // pred_region
      _
    $region17: #{tpu_custom_call.1} parent=1 // pred_fallthru
      _
    %v19 = vld [vmem:[%s1] sm:$0xf]
    %v20 = vld [vmem:[%s0] sm:$0xff]
    %v21 = vld [vmem:[%s0 + $0x8] sm:$0xff]
    %v22 = vld [vmem:[%s0 + $0x10] sm:$0x33]
    %v23 = vld [vmem:[%s0 + $0x18] sm:$0x33]
    %v28 = vunpack.c.l.b16 %v20
    %v29 = vunpack.c.h.b16 %v20
    %v30 = vunpack.c.l.b16 %v21
    %v31 = vunpack.c.h.b16 %v21
    %v32 = vunpack.c.l.b16 %v22
    %v33 = vunpack.c.h.b16 %v22
    %v34 = vunpack.c.l.b16 %v23
    %v35 = vunpack.c.h.b16 %v23
    %v36 = vpack.c.b16 %v32, %v28
    %v37 = vpack.c.b16 %v33, %v29
    %v38 = vpack.c.b16 %v34, %v30
    %v39 = vpack.c.b16 %v35, %v31
    %vm40 = vcmask 97280
    %v42 = vsel %vm40, %v19, 0
    %vm44 = vcmask 1045504
    %v46 = vsel %vm44, %v36, 0
    %v49 = vsel %vm44, %v37, 0
    %v52 = vsel %vm44, %v38, 0
    %v55 = vsel %vm44, %v39, 0
    %57 = vmatpush.bf16.msra.mxu0 0
    %58 = vmatpush.bf16.msra.mxu0 0
    %59 = vmatpush.bf16.msra.mxu0 0
    %60 = vmatpush.bf16.msra.mxu0 0
    %61 = vmatpush.bf16.msra.mxu0 0
    %62 = vmatpush.bf16.msra.mxu0 0
    %63 = vmatpush.bf16.msra.mxu0 0
    %64 = vmatpush.bf16.msra.mxu0 %v46
    %65 = vmatmul.bf16.gmra.mxu0 %v42
    %v66 = vpop.f32.mrf.mxu0
    %v67 = vadd.f32 0.0, %v66
    %v68 = vpop.f32.mrf.mxu0
    %69 = vdwg.mxu0
    %70 = vmatpush.bf16.msra.mxu0 0
    %71 = vmatpush.bf16.msra.mxu0 0
    %72 = vmatpush.bf16.msra.mxu0 0
    %73 = vmatpush.bf16.msra.mxu0 0
    %74 = vmatpush.bf16.msra.mxu0 0
    %75 = vmatpush.bf16.msra.mxu0 0
    %76 = vmatpush.bf16.msra.mxu0 0
    %77 = vmatpush.bf16.msra.mxu0 %v49
    %78 = vmatmul.bf16.gmra.mxu0 %v42
    %v79 = vpop.f32.mrf.mxu0
    %v80 = vadd.f32 0.0, %v79
    %v81 = vpop.f32.mrf.mxu0
    %82 = vdwg.mxu0
    %83 = vmatpush.bf16.msra.mxu0 0
    %84 = vmatpush.bf16.msra.mxu0 0
    %85 = vmatpush.bf16.msra.mxu0 0
    %86 = vmatpush.bf16.msra.mxu0 0
    %87 = vmatpush.bf16.msra.mxu0 0
    %88 = vmatpush.bf16.msra.mxu0 0
    %89 = vmatpush.bf16.msra.mxu0 0
    %90 = vmatpush.bf16.msra.mxu0 %v52
    %91 = vmatmul.bf16.gmra.mxu0 %v42
    %v92 = vpop.f32.mrf.mxu0
    %v93 = vadd.f32 0.0, %v92
    %v94 = vpop.f32.mrf.mxu0
    %95 = vdwg.mxu0
    %96 = vmatpush.bf16.msra.mxu0 0
    %97 = vmatpush.bf16.msra.mxu0 0
    %98 = vmatpush.bf16.msra.mxu0 0
    %99 = vmatpush.bf16.msra.mxu0 0
    %100 = vmatpush.bf16.msra.mxu0 0
    %101 = vmatpush.bf16.msra.mxu0 0
    %102 = vmatpush.bf16.msra.mxu0 0
    %103 = vmatpush.bf16.msra.mxu0 %v55
    %104 = vmatmul.bf16.gmra.mxu0 %v42
    %v105 = vpop.f32.mrf.mxu0
    %v106 = vadd.f32 0.0, %v105
    %v107 = vpop.f32.mrf.mxu0
    %108 = vdwg.mxu0
    %v109 = vadd.f32 %v67, %v80
    %v110 = vadd.f32 %v109, %v93
    %v111 = vadd.f32 %v110, %v106
    %112 = vadd.xlane.f32.xlu0 %v111
    %v113 = vpop.xlane.xlu0 %112
    %v114 = vadd.f32 %v113, 0.0
    %v115 = vmul.f32 %v67, %v67
    %v116 = vmul.f32 %v80, %v80
    %v117 = vmul.f32 %v93, %v93
    %v118 = vmul.f32 %v106, %v106
    %v119 = vadd.f32 %v115, %v116
    %v120 = vadd.f32 %v119, %v117
    %v121 = vadd.f32 %v120, %v118
    %122 = vadd.xlane.f32.xlu0 %v121
    %v123 = vpop.xlane.xlu0 %122
    %v124 = vadd.f32 %v123, 0.0
    %s125 = scalar_lea.vmem %s1, 4
    %v126 = vld [vmem:[%s125] sm:$0xf]
    %s127 = scalar_lea.vmem %s0, 32
    %v128 = vld [vmem:[%s127] sm:$0xff]
    %v129 = vld [vmem:[%s127 + $0x8] sm:$0xff]
    %v130 = vld [vmem:[%s127 + $0x10] sm:$0x33]
    %v131 = vld [vmem:[%s127 + $0x18] sm:$0x33]
    %v136 = vunpack.c.l.b16 %v128
    %v137 = vunpack.c.h.b16 %v128
    %v138 = vunpack.c.l.b16 %v129
    %v139 = vunpack.c.h.b16 %v129
    %v140 = vunpack.c.l.b16 %v130
    %v141 = vunpack.c.h.b16 %v130
    %v142 = vunpack.c.l.b16 %v131
    %v143 = vunpack.c.h.b16 %v131
    %v144 = vpack.c.b16 %v140, %v136
    %v145 = vpack.c.b16 %v141, %v137
    %v146 = vpack.c.b16 %v142, %v138
    %v147 = vpack.c.b16 %v143, %v139
    %v149 = vsel %vm40, %v126, 0
    %v152 = vsel %vm44, %v144, 0
    %v155 = vsel %vm44, %v145, 0
    %v158 = vsel %vm44, %v146, 0
    %v161 = vsel %vm44, %v147, 0
    %163 = vmatpush.bf16.msra.mxu0 0
    %164 = vmatpush.bf16.msra.mxu0 0
    %165 = vmatpush.bf16.msra.mxu0 0
    %166 = vmatpush.bf16.msra.mxu0 0
    %167 = vmatpush.bf16.msra.mxu0 0
    %168 = vmatpush.bf16.msra.mxu0 0
    %169 = vmatpush.bf16.msra.mxu0 0
    %170 = vmatpush.bf16.msra.mxu0 %v152
    %171 = vmatmul.bf16.gmra.mxu0 %v149
    %v172 = vpop.f32.mrf.mxu0
    %v173 = vadd.f32 0.0, %v172
    %v174 = vpop.f32.mrf.mxu0
    %175 = vdwg.mxu0
    %176 = vmatpush.bf16.msra.mxu0 0
    %177 = vmatpush.bf16.msra.mxu0 0
    %178 = vmatpush.bf16.msra.mxu0 0
    %179 = vmatpush.bf16.msra.mxu0 0
    %180 = vmatpush.bf16.msra.mxu0 0
    %181 = vmatpush.bf16.msra.mxu0 0
    %182 = vmatpush.bf16.msra.mxu0 0
    %183 = vmatpush.bf16.msra.mxu0 %v155
    %184 = vmatmul.bf16.gmra.mxu0 %v149
    %v185 = vpop.f32.mrf.mxu0
    %v186 = vadd.f32 0.0, %v185
    %v187 = vpop.f32.mrf.mxu0
    %188 = vdwg.mxu0
    %189 = vmatpush.bf16.msra.mxu0 0
    %190 = vmatpush.bf16.msra.mxu0 0
    %191 = vmatpush.bf16.msra.mxu0 0
    %192 = vmatpush.bf16.msra.mxu0 0
    %193 = vmatpush.bf16.msra.mxu0 0
    %194 = vmatpush.bf16.msra.mxu0 0
    %195 = vmatpush.bf16.msra.mxu0 0
    %196 = vmatpush.bf16.msra.mxu0 %v158
    %197 = vmatmul.bf16.gmra.mxu0 %v149
    %v198 = vpop.f32.mrf.mxu0
    %v199 = vadd.f32 0.0, %v198
    %v200 = vpop.f32.mrf.mxu0
    %201 = vdwg.mxu0
    %202 = vmatpush.bf16.msra.mxu0 0
    %203 = vmatpush.bf16.msra.mxu0 0
    %204 = vmatpush.bf16.msra.mxu0 0
    %205 = vmatpush.bf16.msra.mxu0 0
    %206 = vmatpush.bf16.msra.mxu0 0
    %207 = vmatpush.bf16.msra.mxu0 0
    %208 = vmatpush.bf16.msra.mxu0 0
    %209 = vmatpush.bf16.msra.mxu0 %v161
    %210 = vmatmul.bf16.gmra.mxu0 %v149
    %v211 = vpop.f32.mrf.mxu0
    %v212 = vadd.f32 0.0, %v211
    %v213 = vpop.f32.mrf.mxu0
    %214 = vdwg.mxu0
    %v215 = vadd.f32 %v173, %v186
    %v216 = vadd.f32 %v215, %v199
    %v217 = vadd.f32 %v216, %v212
    %218 = vadd.xlane.f32.xlu0 %v217
    %v219 = vpop.xlane.xlu0 %218
    %v220 = vadd.f32 %v114, %v219
    %v221 = vmul.f32 %v173, %v173
    %v222 = vmul.f32 %v186, %v186
    %v223 = vmul.f32 %v199, %v199
    %v224 = vmul.f32 %v212, %v212
    %v225 = vadd.f32 %v221, %v222
    %v226 = vadd.f32 %v225, %v223
    %v227 = vadd.f32 %v226, %v224
    %228 = vadd.xlane.f32.xlu0 %v227
    %v229 = vpop.xlane.xlu0 %228
    %v230 = vadd.f32 %v124, %v229
    %s231 = scalar_lea.vmem %s1, 8
    %v232 = vld [vmem:[%s231] sm:$0xf]
    %s233 = scalar_lea.vmem %s0, 64
    %v234 = vld [vmem:[%s233] sm:$0xff]
    %v235 = vld [vmem:[%s233 + $0x8] sm:$0xff]
    %v236 = vld [vmem:[%s233 + $0x10] sm:$0x33]
    %v237 = vld [vmem:[%s233 + $0x18] sm:$0x33]
    %v242 = vunpack.c.l.b16 %v234
    %v243 = vunpack.c.h.b16 %v234
    %v244 = vunpack.c.l.b16 %v235
    %v245 = vunpack.c.h.b16 %v235
    %v246 = vunpack.c.l.b16 %v236
    %v247 = vunpack.c.h.b16 %v236
    %v248 = vunpack.c.l.b16 %v237
    %v249 = vunpack.c.h.b16 %v237
    %v250 = vpack.c.b16 %v246, %v242
    %v251 = vpack.c.b16 %v247, %v243
    %v252 = vpack.c.b16 %v248, %v244
    %v253 = vpack.c.b16 %v249, %v245
    %v255 = vsel %vm40, %v232, 0
    %v258 = vsel %vm44, %v250, 0
    %v261 = vsel %vm44, %v251, 0
    %v264 = vsel %vm44, %v252, 0
    %v267 = vsel %vm44, %v253, 0
    %269 = vmatpush.bf16.msra.mxu0 0
    %270 = vmatpush.bf16.msra.mxu0 0
    %271 = vmatpush.bf16.msra.mxu0 0
    %272 = vmatpush.bf16.msra.mxu0 0
    %273 = vmatpush.bf16.msra.mxu0 0
    %274 = vmatpush.bf16.msra.mxu0 0
    %275 = vmatpush.bf16.msra.mxu0 0
    %276 = vmatpush.bf16.msra.mxu0 %v258
    %277 = vmatmul.bf16.gmra.mxu0 %v255
    %v278 = vpop.f32.mrf.mxu0
    %v279 = vadd.f32 0.0, %v278
    %v280 = vpop.f32.mrf.mxu0
    %281 = vdwg.mxu0
    %282 = vmatpush.bf16.msra.mxu0 0
    %283 = vmatpush.bf16.msra.mxu0 0
    %284 = vmatpush.bf16.msra.mxu0 0
    %285 = vmatpush.bf16.msra.mxu0 0
    %286 = vmatpush.bf16.msra.mxu0 0
    %287 = vmatpush.bf16.msra.mxu0 0
    %288 = vmatpush.bf16.msra.mxu0 0
    %289 = vmatpush.bf16.msra.mxu0 %v261
    %290 = vmatmul.bf16.gmra.mxu0 %v255
    %v291 = vpop.f32.mrf.mxu0
    %v292 = vadd.f32 0.0, %v291
    %v293 = vpop.f32.mrf.mxu0
    %294 = vdwg.mxu0
    %295 = vmatpush.bf16.msra.mxu0 0
    %296 = vmatpush.bf16.msra.mxu0 0
    %297 = vmatpush.bf16.msra.mxu0 0
    %298 = vmatpush.bf16.msra.mxu0 0
    %299 = vmatpush.bf16.msra.mxu0 0
    %300 = vmatpush.bf16.msra.mxu0 0
    %301 = vmatpush.bf16.msra.mxu0 0
    %302 = vmatpush.bf16.msra.mxu0 %v264
    %303 = vmatmul.bf16.gmra.mxu0 %v255
    %v304 = vpop.f32.mrf.mxu0
    %v305 = vadd.f32 0.0, %v304
    %v306 = vpop.f32.mrf.mxu0
    %307 = vdwg.mxu0
    %308 = vmatpush.bf16.msra.mxu0 0
    %309 = vmatpush.bf16.msra.mxu0 0
    %310 = vmatpush.bf16.msra.mxu0 0
    %311 = vmatpush.bf16.msra.mxu0 0
    %312 = vmatpush.bf16.msra.mxu0 0
    %313 = vmatpush.bf16.msra.mxu0 0
    %314 = vmatpush.bf16.msra.mxu0 0
    %315 = vmatpush.bf16.msra.mxu0 %v267
    %316 = vmatmul.bf16.gmra.mxu0 %v255
    %v317 = vpop.f32.mrf.mxu0
    %v318 = vadd.f32 0.0, %v317
    %v319 = vpop.f32.mrf.mxu0
    %320 = vdwg.mxu0
    %v321 = vadd.f32 %v279, %v292
    %v322 = vadd.f32 %v321, %v305
    %v323 = vadd.f32 %v322, %v318
    %324 = vadd.xlane.f32.xlu0 %v323
    %v325 = vpop.xlane.xlu0 %324
    %v326 = vadd.f32 %v220, %v325
    %v327 = vmul.f32 %v279, %v279
    %v328 = vmul.f32 %v292, %v292
    %v329 = vmul.f32 %v305, %v305
    %v330 = vmul.f32 %v318, %v318
    %v331 = vadd.f32 %v327, %v328
    %v332 = vadd.f32 %v331, %v329
    %v333 = vadd.f32 %v332, %v330
    %334 = vadd.xlane.f32.xlu0 %v333
    %v335 = vpop.xlane.xlu0 %334
    %v336 = vadd.f32 %v230, %v335
    %s337 = scalar_lea.vmem %s1, 12
    %v338 = vld [vmem:[%s337] sm:$0xf]
    %s339 = scalar_lea.vmem %s0, 96
    %v340 = vld [vmem:[%s339] sm:$0xff]
    %v341 = vld [vmem:[%s339 + $0x8] sm:$0xff]
    %v342 = vld [vmem:[%s339 + $0x10] sm:$0x33]
    %v343 = vld [vmem:[%s339 + $0x18] sm:$0x33]
    %v348 = vunpack.c.l.b16 %v340
    %v349 = vunpack.c.h.b16 %v340
    %v350 = vunpack.c.l.b16 %v341
    %v351 = vunpack.c.h.b16 %v341
    %v352 = vunpack.c.l.b16 %v342
    %v353 = vunpack.c.h.b16 %v342
    %v354 = vunpack.c.l.b16 %v343
    %v355 = vunpack.c.h.b16 %v343
    %v356 = vpack.c.b16 %v352, %v348
    %v357 = vpack.c.b16 %v353, %v349
    %v358 = vpack.c.b16 %v354, %v350
    %v359 = vpack.c.b16 %v355, %v351
    %v361 = vsel %vm40, %v338, 0
    %v364 = vsel %vm44, %v356, 0
    %v367 = vsel %vm44, %v357, 0
    %v370 = vsel %vm44, %v358, 0
    %v373 = vsel %vm44, %v359, 0
    %375 = vmatpush.bf16.msra.mxu0 0
    %376 = vmatpush.bf16.msra.mxu0 0
    %377 = vmatpush.bf16.msra.mxu0 0
    %378 = vmatpush.bf16.msra.mxu0 0
    %379 = vmatpush.bf16.msra.mxu0 0
    %380 = vmatpush.bf16.msra.mxu0 0
    %381 = vmatpush.bf16.msra.mxu0 0
    %382 = vmatpush.bf16.msra.mxu0 %v364
    %383 = vmatmul.bf16.gmra.mxu0 %v361
    %v384 = vpop.f32.mrf.mxu0
    %v385 = vadd.f32 0.0, %v384
    %v386 = vpop.f32.mrf.mxu0
    %387 = vdwg.mxu0
    %388 = vmatpush.bf16.msra.mxu0 0
    %389 = vmatpush.bf16.msra.mxu0 0
    %390 = vmatpush.bf16.msra.mxu0 0
    %391 = vmatpush.bf16.msra.mxu0 0
    %392 = vmatpush.bf16.msra.mxu0 0
    %393 = vmatpush.bf16.msra.mxu0 0
    %394 = vmatpush.bf16.msra.mxu0 0
    %395 = vmatpush.bf16.msra.mxu0 %v367
    %396 = vmatmul.bf16.gmra.mxu0 %v361
    %v397 = vpop.f32.mrf.mxu0
    %v398 = vadd.f32 0.0, %v397
    %v399 = vpop.f32.mrf.mxu0
    %400 = vdwg.mxu0
    %401 = vmatpush.bf16.msra.mxu0 0
    %402 = vmatpush.bf16.msra.mxu0 0
    %403 = vmatpush.bf16.msra.mxu0 0
    %404 = vmatpush.bf16.msra.mxu0 0
    %405 = vmatpush.bf16.msra.mxu0 0
    %406 = vmatpush.bf16.msra.mxu0 0
    %407 = vmatpush.bf16.msra.mxu0 0
    %408 = vmatpush.bf16.msra.mxu0 %v370
    %409 = vmatmul.bf16.gmra.mxu0 %v361
    %v410 = vpop.f32.mrf.mxu0
    %v411 = vadd.f32 0.0, %v410
    %v412 = vpop.f32.mrf.mxu0
    %413 = vdwg.mxu0
    %414 = vmatpush.bf16.msra.mxu0 0
    %415 = vmatpush.bf16.msra.mxu0 0
    %416 = vmatpush.bf16.msra.mxu0 0
    %417 = vmatpush.bf16.msra.mxu0 0
    %418 = vmatpush.bf16.msra.mxu0 0
    %419 = vmatpush.bf16.msra.mxu0 0
    %420 = vmatpush.bf16.msra.mxu0 0
    %421 = vmatpush.bf16.msra.mxu0 %v373
    %422 = vmatmul.bf16.gmra.mxu0 %v361
    %v423 = vpop.f32.mrf.mxu0
    %v424 = vadd.f32 0.0, %v423
    %v425 = vpop.f32.mrf.mxu0
    %426 = vdwg.mxu0
    %v427 = vadd.f32 %v385, %v398
    %v428 = vadd.f32 %v427, %v411
    %v429 = vadd.f32 %v428, %v424
    %430 = vadd.xlane.f32.xlu0 %v429
    %v431 = vpop.xlane.xlu0 %430
    %v432 = vadd.f32 %v326, %v431
    %v433 = vmul.f32 %v385, %v385
    %v434 = vmul.f32 %v398, %v398
    %v435 = vmul.f32 %v411, %v411
    %v436 = vmul.f32 %v424, %v424
    %v437 = vadd.f32 %v433, %v434
    %v438 = vadd.f32 %v437, %v435
    %v439 = vadd.f32 %v438, %v436
    %440 = vadd.xlane.f32.xlu0 %v439
    %v441 = vpop.xlane.xlu0 %440
    %v442 = vadd.f32 %v336, %v441
    %v443 = vmul.f32 %v432, 0.00048828125
    %v444 = vmul.f32 %v442, 0.00048828125
    %v445 = vmul.f32 %v443, %v443
    %v446 = vsub.f32 %v444, %v445
    %v447 = vadd.f32 %v446, 1e-05
    %v448 = vrsqrt.pop %v447
    %v449 = vmul.f32 %v448, %v447
    %v450 = vmul.f32 %v449, %v448
    %v451 = vmul.f32 0.5, %v450
    %v452 = vsub.f32 1.5, %v451
    %v453 = vmul.f32 %v448, %v452
    %vm454 = vweird.f32 %v447
    %vm455 = vweird.f32 %v448
    %vm456 = vmor %vm454, %vm455
    %v457 = vsel %vm456, %v448, %v453
    %v458 = vld [vmem:[%s2] sm:$0xff]
    %v459 = vmul.f32 %v457, %v458
    %v460 = vld [vmem:[%s3] sm:$0xff]
    %v461 = vmul.f32 %v443, %v459
    %v462 = vsub.f32 %v460, %v461
    %464 = vset.pattern.permute.xlu0 0
    %465 = vperm.xlu0 %464, %v459
    %v466 = vpop.permute.xlu0 %465
    %v468 = vmul.f32 %v67, %v466
    %v469 = vmul.f32 %v80, %v466
    %v470 = vmul.f32 %v93, %v466
    %v471 = vmul.f32 %v106, %v466
    %473 = vset.pattern.permute.xlu0 0
    %474 = vperm.xlu0 %473, %v462
    %v475 = vpop.permute.xlu0 %474
    %v477 = vadd.f32 %v468, %v475
    %v478 = vadd.f32 %v469, %v475
    %v479 = vadd.f32 %v470, %v475
    %v480 = vadd.f32 %v471, %v475
    %v481 = vmax.f32 %v477, 0.0
    %v482 = vmax.f32 %v478, 0.0
    %v483 = vmax.f32 %v479, 0.0
    %v484 = vmax.f32 %v480, 0.0
    %v485 = vpack.c.bf16 %v482, %v481
    %v486 = vpack.c.bf16 %v484, %v483
    %487 = vst [vmem:[#allocation2] sm:$0xff] %v485
    %488 = vst [vmem:[#allocation2 + $0x8] sm:$0xff] %v486
    %v489 = vmul.f32 %v173, %v466
    %v490 = vmul.f32 %v186, %v466
    %v491 = vmul.f32 %v199, %v466
    %v492 = vmul.f32 %v212, %v466
    %v493 = vadd.f32 %v489, %v475
    %v494 = vadd.f32 %v490, %v475
    %v495 = vadd.f32 %v491, %v475
    %v496 = vadd.f32 %v492, %v475
    %v497 = vmax.f32 %v493, 0.0
    %v498 = vmax.f32 %v494, 0.0
    %v499 = vmax.f32 %v495, 0.0
    %v500 = vmax.f32 %v496, 0.0
    %v501 = vpack.c.bf16 %v498, %v497
    %v502 = vpack.c.bf16 %v500, %v499
    %503 = vst [vmem:[#allocation2 + $0x10] sm:$0xff] %v501
    %504 = vst [vmem:[#allocation2 + $0x18] sm:$0xff] %v502
    %v505 = vmul.f32 %v279, %v466
    %v506 = vmul.f32 %v292, %v466
    %v507 = vmul.f32 %v305, %v466
    %v508 = vmul.f32 %v318, %v466
    %v509 = vadd.f32 %v505, %v475
    %v510 = vadd.f32 %v506, %v475
    %v511 = vadd.f32 %v507, %v475
    %v512 = vadd.f32 %v508, %v475
    %v513 = vmax.f32 %v509, 0.0
    %v514 = vmax.f32 %v510, 0.0
    %v515 = vmax.f32 %v511, 0.0
    %v516 = vmax.f32 %v512, 0.0
    %v517 = vpack.c.bf16 %v514, %v513
    %v518 = vpack.c.bf16 %v516, %v515
    %519 = vst [vmem:[#allocation2 + $0x20] sm:$0xff] %v517
    %520 = vst [vmem:[#allocation2 + $0x28] sm:$0xff] %v518
    %v521 = vmul.f32 %v385, %v466
    %v522 = vmul.f32 %v398, %v466
    %v523 = vmul.f32 %v411, %v466
    %v524 = vmul.f32 %v424, %v466
    %v525 = vadd.f32 %v521, %v475
    %v526 = vadd.f32 %v522, %v475
    %v527 = vadd.f32 %v523, %v475
    %v528 = vadd.f32 %v524, %v475
    %v529 = vmax.f32 %v525, 0.0
    %v530 = vmax.f32 %v526, 0.0
    %v531 = vmax.f32 %v527, 0.0
    %v532 = vmax.f32 %v528, 0.0
    %v533 = vpack.c.bf16 %v530, %v529
    %v534 = vpack.c.bf16 %v532, %v531
    %535 = vst [vmem:[#allocation2 + $0x30] sm:$0xff] %v533
    %536 = vst [vmem:[#allocation2 + $0x38] sm:$0xff] %v534
    // Predicated region
    $region18: #{tpu_custom_call.1} parent=1 // pred_check
      _
    $region19: #{tpu_custom_call.1} parent=1 // pred_check_branch
      %538 = sbr.rel (0) target = $region21
    $region20: #{tpu_custom_call.1} parent=1 // pred_region
      %540 = vsyncadd [#allocation3], 0
      %s542 = sshll.u32 [#allocation2], 4
      %s543 = int_to_ptr.vmem [resolvable:$true] %s542
      %s544 = sshll.u32 %s4, 4
      %s545 = int_to_ptr.hbm [resolvable:$true] %s544
      %547 = dma.vmem_to_hbm [thread:$0]  %s543, 1024, %s545, [#allocation3]
    $region21: #{tpu_custom_call.1} parent=1 // pred_fallthru
      _
    // Predicated region
    $region22: #{tpu_custom_call.1} parent=1 // pred_check
      _
    $region23: #{tpu_custom_call.1} parent=1 // pred_check_branch
      %549 = sbr.rel (0) target = $region25
    $region24: #{tpu_custom_call.1} parent=1 // pred_region
      %551 = dma.done [#allocation3], 1024
    $region25: #{tpu_custom_call.1} parent=1 // pred_fallthru
      _
    %552 = vsyncpa [#allocation3], 1

</llo_original>
